<compile_context>
chip_gen: v5e
topology: v5e:2x2
jax: 0.10.0
libtpu: 0.0.40
codegen_flags: <defaults>
</compile_context>

<pallas_src>
import functools

import jax
import jax.numpy as jnp
import numpy as np
from jax.experimental import pallas as pl
from jax.experimental.pallas import tpu as pltpu


def _round_up(x, m):
    return (x + m - 1) // m * m


def _fused_lora_kernel(x_ref, w_ref, b_ref, o_ref):
    """One (tm, tn) output tile: o = x @ W_eff^T + b, f32 MXU accumulation.

    x arrives in its original dtype (f32) and is cast to the weight's compute
    dtype in-register, so no separate XLA cast pass over the activations.
    """
    x = x_ref[...].astype(w_ref.dtype)
    acc = jnp.dot(x, w_ref[...], preferred_element_type=jnp.float32)
    o_ref[...] = (acc + b_ref[...]).astype(o_ref.dtype)


def prepare_lora_left_params(w_org, b_org, w_down, w_up, *, compute_dtype=jnp.bfloat16):
    """One-time weight prep: fold LoRA branch, transpose to x @ W^T layout, cast.

    Must be re-run whenever W_org / W_down / W_up change (learnable LoRA);
    a stale cached fold would silently change forward().
    Returns (w_eff_t [in, out] compute_dtype, bias [1, out] f32).
    """
    # W_eff = W_org - W_up @ W_down  (exactly the forward's subtraction, folded once)
    w_eff = w_org.astype(jnp.float32) - jnp.dot(
        w_up.astype(jnp.float32), w_down.astype(jnp.float32),
        preferred_element_type=jnp.float32)                          # [out, in]
    w_eff_t = jnp.transpose(w_eff).astype(compute_dtype)             # [in, out]
    bias = b_org.astype(jnp.float32).reshape(1, -1)                  # [1, out]
    return w_eff_t, bias


@functools.partial(jax.jit,
                   static_argnames=("tm", "tn", "min_m_for_pallas", "out_dtype"))
def lora_left_forward(x, w_eff_t, bias, *, tm=256, tn=512,
                      min_m_for_pallas=0, out_dtype=None):
    """x: [B, S, in_dim] (float); w_eff_t: [in_dim, out_dim]; bias: [1, out_dim] f32."""
    B, S, in_dim = x.shape
    out_dim = w_eff_t.shape[1]
    M = B * S
    out_dtype = x.dtype if out_dtype is None else out_dtype

    x2 = x.reshape(M, in_dim)            # contiguous reshape -> free

    # Small-M fast path: for tiny problems XLA's fused dot beats kernel-launch
    # overhead on every generation.  Disabled by default (threshold 0) so the
    # demo below runs the Pallas path; set min_m_for_pallas~512 in production.
    if M < min_m_for_pallas:
        acc = jnp.dot(x2.astype(w_eff_t.dtype), w_eff_t,
                      preferred_element_type=jnp.float32)
        return (acc + bias).astype(out_dtype).reshape(B, S, out_dim)

    # M tile: multiple of 16 (sublane packing).  No M padding: the ragged last
    # block (when tm doesn't divide M) is handled by Pallas -- OOB reads only
    # feed output rows that are discarded, OOB writes are dropped.
    tm = min(tm, _round_up(M, 16))

    # N tile: full out_dim unless out_dim is a large 128-multiple worth splitting.
    # Full-dim block keeps stores lane-dense-ish and avoids any column padding
    # or post-call slicing (160-wide tail -> a few masked stores, far cheaper
    # than 60% extra output bytes + a copy kernel).
    if out_dim > tn and out_dim % 128 == 0:
        while out_dim % tn:
            tn -= 128
    else:
        tn = out_dim

    grid = (pl.cdiv(M, tm), out_dim // tn)

    # TODO(synk): add a K ("arbitrary") grid axis + f32 VMEM accumulator scratch
    # (pl.when init/finalize) if this kernel is reused with in_dim large enough
    # to blow past v7x's 64 MiB VMEM with untiled K.
    out = pl.pallas_call(
        _fused_lora_kernel,
        out_shape=jax.ShapeDtypeStruct((M, out_dim), out_dtype),
        grid_spec=pltpu.PrefetchScalarGridSpec(
            num_scalar_prefetch=0,
            grid=grid,
            in_specs=[
                pl.BlockSpec((tm, in_dim), lambda i, j: (i, 0)),   # x tile (orig dtype)
                pl.BlockSpec((in_dim, tn), lambda i, j: (0, j)),   # W_eff^T tile (bf16)
                pl.BlockSpec((1, tn), lambda i, j: (0, j)),        # bias tile (f32)
            ],
            out_specs=pl.BlockSpec((tm, tn), lambda i, j: (i, j)),
        ),
        compiler_params=pltpu.CompilerParams(
            dimension_semantics=("parallel", "parallel")),
    )(x2, w_eff_t, bias)

    return out.reshape(B, S, out_dim)


def _reference(x, w_org, b_org, w_down, w_up):
    """Unfused f32 reference in the original module's two-branch form."""
    x32 = x.astype(jnp.float32)
    org = jnp.einsum("bsk,ok->bso", x32, w_org.astype(jnp.float32)) + b_org.astype(jnp.float32)
    down = jnp.einsum("bsk,rk->bsr", x32, w_down.astype(jnp.float32))
    lora = jnp.einsum("bsr,or->bso", down, w_up.astype(jnp.float32))
    return org - lora


if __name__ == "__main__":
    # Shapes consistent with the module: org Linear(in=64, out=160), lora_dim=4.
    # out_dim (160) >= 40 * lora_dim (160), so lora_dim stays 4 (no rank reduction).
    B, S, in_dim, out_dim, lora_dim = 2, 8, 64, 160, 4

    key = jax.random.PRNGKey(0)
    kx, ko, kb, kd, ku = jax.random.split(key, 5)

    x = jax.random.normal(kx, (B, S, in_dim), dtype=jnp.float32)
    w_org = jax.random.normal(ko, (out_dim, in_dim), dtype=jnp.float32) * 0.05
    b_org = jax.random.normal(kb, (out_dim,), dtype=jnp.float32) * 0.05
    # PyTorch init: kaiming_uniform_(a=1) for lora_down, zeros_ for lora_up.
    # Zero lora_up would make the LoRA branch trivially zero, so use small
    # deterministic random values for both to exercise the full compute path.
    w_down = jax.random.normal(kd, (lora_dim, in_dim), dtype=jnp.float32) * 0.1
    w_up = jax.random.normal(ku, (out_dim, lora_dim), dtype=jnp.float32) * 0.1

    # One-time weight prep (fold + transpose + bf16 cast), reused across forwards.
    w_eff_t, bias = prepare_lora_left_params(w_org, b_org, w_down, w_up)

    out = lora_left_forward(x, w_eff_t, bias)
    out = jax.block_until_ready(out)
    assert out.shape == (B, S, out_dim), out.shape

    ref = _reference(x, w_org, b_org, w_down, w_up)
    # bf16 matmul operands (f32 accumulation) -> loosened tolerance vs f32 reference.
    np.testing.assert_allclose(np.asarray(out), np.asarray(ref), rtol=2e-2, atol=2e-2)

    print("KERNEL_OK")
</pallas_src>

<mosaic_0001>
module attributes {stable_mosaic.version = 11 : i64} {
  func.func @_fused_lora_kernel(%arg0: i32, %arg1: i32, %arg2: memref<16x64xf32, #tpu.memory_space<vmem>>, %arg3: memref<64x160xbf16, #tpu.memory_space<vmem>>, %arg4: memref<1x160xf32, #tpu.memory_space<vmem>>, %arg5: memref<16x160xf32, #tpu.memory_space<vmem>>) attributes {dimension_semantics = [#tpu.dimension_semantics<parallel>, #tpu.dimension_semantics<parallel>], iteration_bounds = array<i64: 1, 1>, scalar_prefetch = 0 : i64, scratch_operands = 0 : i64, tpu.core_type = #tpu.core_type<tc>, window_params = [{transform_indices = @transform_0, window_bounds = array<i64: 16, 64>}, {transform_indices = @transform_1, window_bounds = array<i64: 64, 160>}, {transform_indices = @transform_2, window_bounds = array<i64: 1, 160>}, {transform_indices = @transform_3, window_bounds = array<i64: 16, 160>}]} {
    %c0 = arith.constant 0 : index
    %c0_0 = arith.constant 0 : index
    %0 = vector.load %arg2[%c0, %c0_0] : memref<16x64xf32, #tpu.memory_space<vmem>>, vector<16x64xf32>
    %1 = arith.truncf %0 : vector<16x64xf32> to vector<16x64xbf16>
    %c0_1 = arith.constant 0 : index
    %c0_2 = arith.constant 0 : index
    %2 = vector.load %arg3[%c0_1, %c0_2] : memref<64x160xbf16, #tpu.memory_space<vmem>>, vector<64x160xbf16>
    %cst = arith.constant dense<0.000000e+00> : vector<16x160xf32>
    %3 = tpu.matmul %1, %2, %cst {dimension_numbers = #tpu.dot_dimension_numbers<[1], [0], [0], [1], [0, 0, 1, 1], [], []>} : vector<16x64xbf16>, vector<64x160xbf16>, vector<16x160xf32> -> vector<16x160xf32>
    %c0_3 = arith.constant 0 : index
    %c0_4 = arith.constant 0 : index
    %4 = vector.load %arg4[%c0_3, %c0_4] : memref<1x160xf32, #tpu.memory_space<vmem>>, vector<1x160xf32>
    %5 = vector.broadcast %4 : vector<1x160xf32> to vector<16x160xf32>
    %6 = arith.addf %3, %5 : vector<16x160xf32>
    %c0_5 = arith.constant 0 : index
    %c0_6 = arith.constant 0 : index
    %7 = vector.load %arg5[%c0_5, %c0_6] : memref<16x160xf32, #tpu.memory_space<vmem>>, vector<16x160xf32>
    tpu.vector_store %arg5[%c0_5, %c0_6], %6 {strides = array<i32>} : memref<16x160xf32, #tpu.memory_space<vmem>>, vector<16x160xf32>,
    return
  }
  func.func @transform_0(%arg0: i32, %arg1: i32) -> (i32, i32) {
    %c0_i32 = arith.constant 0 : i32
    %c0_i32_0 = arith.constant 0 : i32
    return %arg0, %c0_i32 : i32, i32
  }
  func.func @transform_1(%arg0: i32, %arg1: i32) -> (i32, i32) {
    %c0_i32 = arith.constant 0 : i32
    %c0_i32_0 = arith.constant 0 : i32
    return %c0_i32, %arg1 : i32, i32
  }
  func.func @transform_2(%arg0: i32, %arg1: i32) -> (i32, i32) {
    %c0_i32 = arith.constant 0 : i32
    %c0_i32_0 = arith.constant 0 : i32
    return %c0_i32, %arg1 : i32, i32
  }
  func.func @transform_3(%arg0: i32, %arg1: i32) -> (i32, i32) {
    %c0_i32 = arith.constant 0 : i32
    return %arg0, %arg1 : i32, i32
  }
}

</mosaic_0001>

<llo_original>
// kernel: lora_left_forward.1
$region0: #{lora_left_forward.1}
  #allocation0 [shape = 'u32[]', space=smem, size = 0x4, offset = 0x4, fixed_abs, tag = 'smem constant byte address 0x4 - core index']
  #allocation1 [shape = 'u32[72,128]{1,0:T(1,128)}', space=vmem, size = 0x9000, scoped, tag = 'internal scratch']
  %s0 = inlined_call_operand.hbm [shape: f32[16,64], index: 0, kind: input, shape index: {}]
  %s1 = inlined_call_operand.hbm [shape: bf16[64,160], index: 1, kind: input, shape index: {}]
  %s2 = inlined_call_operand.vmem [shape: f32[1,160], index: 2, kind: input, shape index: {}]
  %s3 = inlined_call_operand.hbm [shape: f32[16,160], index: 3, kind: output, shape index: {}]
  %s4 = sld [smem:[#allocation0]]
  $region30: #{lora_left_forward.1} parent=0
    _
  %s6 = ssub.s32 1, %s4
  %s7 = scalar_select 0, %s6, %s4
  $region1: #{lora_left_forward.1} parent=0
    #allocation2 [shape = 'u8[8192]{0}', space=vmem, size = 0x2000, scoped, tag = 'input window, operand 0, single buffered']
    #allocation3 [shape = 's32[1]{0}', space=sflag, size = 0x4, scoped, tag = 'scoped memory for lora_left_forward.1']
    #allocation4 [shape = 's32[1]{0}', space=sflag, size = 0x4, scoped, tag = 'scoped memory for lora_left_forward.1']
    #allocation5 [shape = 'u8[32768]{0}', space=vmem, size = 0x8000, scoped, tag = 'input window, operand 1, single buffered']
    #allocation6 [shape = 's32[1]{0}', space=sflag, size = 0x4, scoped, tag = 'scoped memory for lora_left_forward.1']
    #allocation7 [shape = 'u8[16384]{0}', space=vmem, size = 0x4000, scoped, tag = 'output window, operand 0, single buffered']
    %8 = vsyncpa [#allocation3], 0
    %9 = vsyncpa [#allocation6], 0
    %10 = vsyncpa [#allocation4], 0
    // Predicated region
    $region2: #{lora_left_forward.1} parent=1 // pred_check
      _
    $region3: #{lora_left_forward.1} parent=1 // pred_check_branch
      %12 = sbr.rel (0) target = $region5
    $region4: #{lora_left_forward.1} parent=1 // pred_region
      %14 = vsyncadd [#allocation3], 0
      %s15 = sshll.u32 %s0, 4
      %s16 = int_to_ptr.hbm [resolvable:$true] %s15
      %s17 = sshll.u32 [#allocation2], 4
      %s18 = int_to_ptr.vmem [resolvable:$true] %s17
      %23 = dma.hbm_to_vmem [thread:$0]  %s16, 256, %s18, [#allocation3], 128, 128, 8
    $region5: #{lora_left_forward.1} parent=1 // pred_fallthru
      _
    // Predicated region
    $region6: #{lora_left_forward.1} parent=1 // pred_check
      _
    $region7: #{lora_left_forward.1} parent=1 // pred_check_branch
      %25 = sbr.rel (0) target = $region9
    $region8: #{lora_left_forward.1} parent=1 // pred_region
      %27 = vsyncadd [#allocation6], 0
      %s28 = sshll.u32 %s1, 4
      %s29 = int_to_ptr.hbm [resolvable:$true] %s28
      %s30 = sshll.u32 [#allocation5], 4
      %s31 = int_to_ptr.vmem [resolvable:$true] %s30
      %36 = dma.hbm_to_vmem [thread:$0]  %s29, 1024, %s31, [#allocation6], 128, 128, 8
    $region9: #{lora_left_forward.1} parent=1 // pred_fallthru
      _
    // Predicated region
    $region10: #{lora_left_forward.1} parent=1 // pred_check
      _
    $region11: #{lora_left_forward.1} parent=1 // pred_check_branch
      %38 = sbr.rel (0) target = $region13
    $region12: #{lora_left_forward.1} parent=1 // pred_region
      _
    $region13: #{lora_left_forward.1} parent=1 // pred_fallthru
      _
    // Predicated region
    $region14: #{lora_left_forward.1} parent=1 // pred_check
      _
    $region15: #{lora_left_forward.1} parent=1 // pred_check_branch
      %40 = sbr.rel (0) target = $region17
    $region16: #{lora_left_forward.1} parent=1 // pred_region
      %42 = dma.done [#allocation3], 256
    $region17: #{lora_left_forward.1} parent=1 // pred_fallthru
      _
    // Predicated region
    $region18: #{lora_left_forward.1} parent=1 // pred_check
      _
    $region19: #{lora_left_forward.1} parent=1 // pred_check_branch
      %44 = sbr.rel (0) target = $region21
    $region20: #{lora_left_forward.1} parent=1 // pred_region
      %46 = dma.done [#allocation6], 1024
    $region21: #{lora_left_forward.1} parent=1 // pred_fallthru
      _
    %v48 = vld [vmem:[#allocation2] sm:$0xff]
    %v49 = vld [vmem:[#allocation2 + $0x8] sm:$0xff]
    %v50 = vpack.c.bf16 %v49, %v48
    %v51 = vld [vmem:[#allocation5] sm:$0xff]
    %v52 = vld [vmem:[#allocation5 + $0x8] sm:$0xff]
    %v53 = vld [vmem:[#allocation5 + $0x10] sm:$0xff]
    %v54 = vld [vmem:[#allocation5 + $0x18] sm:$0xff]
    %v55 = vld [vmem:[#allocation5 + $0x20] sm:$0xff]
    %v56 = vld [vmem:[#allocation5 + $0x28] sm:$0xff]
    %v57 = vld [vmem:[#allocation5 + $0x30] sm:$0xff]
    %v58 = vld [vmem:[#allocation5 + $0x38] sm:$0xff]
    %v59 = vld [vmem:[%s2] sm:$0x3]
    %v61 = vperm.slane %v59, 0
    %v62 = vperm.slane %v59, 1
    %v73 = vunpack.c.l.b16 %v51
    %v74 = vunpack.c.h.b16 %v51
    %v75 = vunpack.c.l.b16 %v52
    %v76 = vunpack.c.h.b16 %v52
    %v77 = vunpack.c.l.b16 %v53
    %v78 = vunpack.c.h.b16 %v53
    %v79 = vunpack.c.l.b16 %v54
    %v80 = vunpack.c.h.b16 %v54
    %v81 = vunpack.c.l.b16 %v55
    %v82 = vunpack.c.h.b16 %v55
    %v83 = vunpack.c.l.b16 %v56
    %v84 = vunpack.c.h.b16 %v56
    %v85 = vunpack.c.l.b16 %v57
    %v86 = vunpack.c.h.b16 %v57
    %v87 = vunpack.c.l.b16 %v58
    %v88 = vunpack.c.h.b16 %v58
    %v89 = vpack.c.b16 %v75, %v73
    %v90 = vpack.c.b16 %v76, %v74
    %v91 = vpack.c.b16 %v79, %v77
    %v92 = vpack.c.b16 %v80, %v78
    %v93 = vpack.c.b16 %v83, %v81
    %v94 = vpack.c.b16 %v84, %v82
    %v95 = vpack.c.b16 %v87, %v85
    %v96 = vpack.c.b16 %v88, %v86
    %vm105 = vcmask 523264
    %v107 = vsel %vm105, %v50, 0
    %109 = vmatpush.bf16.msra.mxu0 0
    %110 = vmatpush.bf16.msra.mxu0 0
    %111 = vmatpush.bf16.msra.mxu0 0
    %112 = vmatpush.bf16.msra.mxu0 0
    %113 = vmatpush.bf16.msra.mxu0 %v95
    %114 = vmatpush.bf16.msra.mxu0 %v93
    %115 = vmatpush.bf16.msra.mxu0 %v91
    %116 = vmatpush.bf16.msra.mxu0 %v89
    %117 = vmatmul.bf16.gmra.mxu0 %v107
    %v118 = vpop.f32.mrf.mxu0
    %v119 = vadd.f32 %v61, %v118
    %v120 = vpop.f32.mrf.mxu0
    %v121 = vadd.f32 %v61, %v120
    %122 = vdwg.mxu0
    %123 = vmatpush.bf16.msra.mxu0 0
    %124 = vmatpush.bf16.msra.mxu0 0
    %125 = vmatpush.bf16.msra.mxu0 0
    %126 = vmatpush.bf16.msra.mxu0 0
    %127 = vmatpush.bf16.msra.mxu0 %v96
    %128 = vmatpush.bf16.msra.mxu0 %v94
    %129 = vmatpush.bf16.msra.mxu0 %v92
    %130 = vmatpush.bf16.msra.mxu0 %v90
    %131 = vmatmul.bf16.gmra.mxu0 %v107
    %v132 = vpop.f32.mrf.mxu0
    %v133 = vadd.f32 %v62, %v132
    %v134 = vpop.f32.mrf.mxu0
    %v135 = vadd.f32 %v62, %v134
    %136 = vdwg.mxu0
    %137 = vst [vmem:[#allocation7] sm:$0xff] %v119
    %vm138 = vcmask 261120
    %139 = vst.msk [vmem:[#allocation7 + $0x8] sm:$0xff] %vm138, %v133
    %140 = vst [vmem:[#allocation7 + $0x10] sm:$0xff] %v121
    %141 = vst.msk [vmem:[#allocation7 + $0x18] sm:$0xff] %vm138, %v135
    // Predicated region
    $region22: #{lora_left_forward.1} parent=1 // pred_check
      _
    $region23: #{lora_left_forward.1} parent=1 // pred_check_branch
      %143 = sbr.rel (0) target = $region25
    $region24: #{lora_left_forward.1} parent=1 // pred_region
      %145 = vsyncadd [#allocation4], 0
      %s146 = sshll.u32 [#allocation7], 4
      %s147 = int_to_ptr.vmem [resolvable:$true] %s146
      %s148 = sshll.u32 %s3, 4
      %s149 = int_to_ptr.hbm [resolvable:$true] %s148
      %154 = dma.vmem_to_hbm [thread:$0]  %s147, 512, %s149, [#allocation4], 256, 256, 16
    $region25: #{lora_left_forward.1} parent=1 // pred_fallthru
      _
    // Predicated region
    $region26: #{lora_left_forward.1} parent=1 // pred_check
      _
    $region27: #{lora_left_forward.1} parent=1 // pred_check_branch
      %156 = sbr.rel (0) target = $region29
    $region28: #{lora_left_forward.1} parent=1 // pred_region
      %158 = dma.done [#allocation4], 512
    $region29: #{lora_left_forward.1} parent=1 // pred_fallthru
      _
    %159 = vsyncpa [#allocation3], 1
    %160 = vsyncpa [#allocation6], 1
    %161 = vsyncpa [#allocation4], 1

</llo_original>
